<compile_context>
chip_gen: v7x
topology: tpu7x:2x2x1
jax: 0.10.0
libtpu: 0.0.40
codegen_flags: <defaults>
</compile_context>

<pallas_src>
from functools import partial

import jax
import jax.numpy as jnp
from jax.experimental import pallas as pl
from jax.experimental.pallas import tpu as pltpu


def _round_up(x, m):
    return (x + m - 1) // m * m


def _num_tensorcores():
    """Best-effort TensorCore count per chip (2 on v7x, else 1)."""
    try:
        kind = jax.devices()[0].device_kind.lower()
        if "v7" in kind:
            return 2
    except Exception:
        pass
    return 1


def _fused_decoder_kernel(x_ref, *refs, n_layers: int, use_bf16_matmul: bool):
    """Fused [Linear -> ReLU]*(n-1) + Linear on one (tile, Din) batch tile.

    refs = (w0, b0, w1, b1, ..., w_{n-1}, b_{n-1}, o_ref).
    Weights are (Din_in, Dout_p) (Dout_p 128-padded; weights may be bf16),
    biases (1, Dout_p) f32.  The running activation stays in VMEM/vregs.
    """
    *wb_refs, o_ref = refs
    h = x_ref[...]
    for i in range(n_layers):
        w = wb_refs[2 * i][...]
        b = wb_refs[2 * i + 1][...]          # (1, Dout) -> single broadcast add
        lhs = h.astype(jnp.bfloat16) if use_bf16_matmul else h
        y = jnp.dot(lhs, w, preferred_element_type=jnp.float32)
        y = y + b                            # f32 bias add
        if i != n_layers - 1:
            y = jnp.maximum(y, 0.0)          # f32 ReLU
        h = y
    o_ref[...] = h.astype(o_ref.dtype)


@partial(jax.jit,
         static_argnames=("tile_b", "use_bf16_matmul", "out_dtype", "num_cores"))
def _decoder_forward_impl(params, x, *, tile_b, use_bf16_matmul, out_dtype,
                          num_cores):
    B, Din = x.shape
    n_layers = len(params)
    dims = [Din] + [w.shape[1] for (w, _) in params]
    # Pad only layer-output (lane) dims to 128; keep Din as-is.
    pdims = [Din] + [_round_up(d, 128) for d in dims[1:]]

    # Batch tiling: minimal padding, and (on v7x) at least one tile per core.
    rows = _round_up(B, 8)
    n_steps = max(pl.cdiv(rows, tile_b), 1)
    if num_cores > 1:
        n_steps = max(n_steps, min(num_cores, rows // 8))
    tile = _round_up(pl.cdiv(rows, n_steps), 8)
    n_steps = pl.cdiv(rows, tile)
    Bp = tile * n_steps

    xp = jnp.pad(x.astype(jnp.float32), ((0, Bp - B), (0, 0)))

    w_dtype = jnp.bfloat16 if use_bf16_matmul else jnp.float32
    padded_wb = []
    in_specs = [pl.BlockSpec((tile, Din), lambda bi: (bi, 0))]
    for li, (w, b) in enumerate(params):
        din, dout = w.shape
        pin, pout = pdims[li], pdims[li + 1]
        wp = jnp.pad(w.astype(jnp.float32), ((0, pin - din), (0, pout - dout)))
        padded_wb.append(wp.astype(w_dtype))                     # pre-cast once
        padded_wb.append(jnp.pad(b.astype(jnp.float32),
                                 (0, pout - dout)).reshape(1, pout))
        # Constant index_map -> weight/bias tiles stay resident across grid steps.
        in_specs.append(pl.BlockSpec((pin, pout), lambda bi: (0, 0)))
        in_specs.append(pl.BlockSpec((1, pout), lambda bi: (0, 0)))

    out_p = pl.pallas_call(
        partial(_fused_decoder_kernel, n_layers=n_layers,
                use_bf16_matmul=use_bf16_matmul),
        out_shape=jax.ShapeDtypeStruct((Bp, pdims[-1]), out_dtype),
        grid=(n_steps,),
        in_specs=in_specs,
        out_specs=pl.BlockSpec((tile, pdims[-1]), lambda bi: (bi, 0)),
        compiler_params=pltpu.CompilerParams(
            dimension_semantics=("parallel",)),
    )(xp, *padded_wb)

    # Slice away batch / feature padding (fused by XLA, same jit).
    return out_p[:B, :dims[-1]]


def decoder_forward(params, sigma, x, *, tile_b=1024, use_bf16_matmul=True,
                    out_dtype=jnp.float32):
    """Equivalent of Decoder.forward: returns (seq(x), sigma).

    params: list of (w, b) with w: (din, dout) [x @ w + b convention], b: (dout,).
    """
    out = _decoder_forward_impl(params, x, tile_b=tile_b,
                                use_bf16_matmul=use_bf16_matmul,
                                out_dtype=out_dtype,
                                num_cores=_num_tensorcores())
    return out, sigma


def init_decoder_params(key, embedding_dim, decompress_dims, data_dim):
    """Deterministic init mimicking PyTorch nn.Linear default U(-1/sqrt(in), 1/sqrt(in))."""
    dims = [embedding_dim] + list(decompress_dims) + [data_dim]
    params = []
    for i in range(len(dims) - 1):
        din, dout = dims[i], dims[i + 1]
        key, kw, kb = jax.random.split(key, 3)
        bound = 1.0 / jnp.sqrt(jnp.float32(din))
        w = jax.random.uniform(kw, (din, dout), jnp.float32, -bound, bound)
        b = jax.random.uniform(kb, (dout,), jnp.float32, -bound, bound)
        params.append((w, b))
    sigma = jnp.ones((data_dim,), jnp.float32) * 0.1
    return params, sigma


def decoder_reference(params, sigma, x):
    """Plain-JAX reference for correctness checking."""
    n_layers = len(params)
    h = x
    for i, (w, b) in enumerate(params):
        h = h @ w + b
        if i != n_layers - 1:
            h = jnp.maximum(h, 0.0)
    return h, sigma


if __name__ == "__main__":
    # Small shapes consistent with the module's forward pass; batch chosen so the
    # kernel exercises batch rounding, feature padding and (on v7x) a 2-step grid.
    batch = 300
    embedding_dim = 32
    decompress_dims = (64, 128)
    data_dim = 48

    key = jax.random.PRNGKey(0)
    key, kx = jax.random.split(key)
    x = jax.random.normal(kx, (batch, embedding_dim), jnp.float32)

    params, sigma = init_decoder_params(key, embedding_dim, decompress_dims, data_dim)

    ref_out, ref_sig = decoder_reference(params, sigma, x)

    # Exact f32 path: must match the reference tightly.
    out32, sig32 = decoder_forward(params, sigma, x, use_bf16_matmul=False)
    out32 = jax.block_until_ready(out32)
    assert out32.shape == (batch, data_dim)
    assert sig32.shape == (data_dim,)
    assert jnp.allclose(out32, ref_out, atol=1e-4, rtol=1e-5), float(
        jnp.max(jnp.abs(out32 - ref_out)))
    assert jnp.allclose(sig32, ref_sig)

    # Default (bf16 MXU inputs, f32 accumulate) path: looser tolerance.
    out, sig = decoder_forward(params, sigma, x)
    out = jax.block_until_ready(out)
    sig = jax.block_until_ready(sig)
    assert out.shape == (batch, data_dim)
    assert jnp.allclose(out, ref_out, atol=5e-2, rtol=5e-2), float(
        jnp.max(jnp.abs(out - ref_out)))
    assert jnp.allclose(sig, ref_sig)

    print("KERNEL_OK")
</pallas_src>

<mosaic_0001>
module attributes {stable_mosaic.version = 11 : i64} {
  func.func @_fused_decoder_kernel(%arg0: i32, %arg1: memref<304x32xf32, #tpu.memory_space<vmem>>, %arg2: memref<32x128xf32, #tpu.memory_space<vmem>>, %arg3: memref<1x128xf32, #tpu.memory_space<vmem>>, %arg4: memref<128x128xf32, #tpu.memory_space<vmem>>, %arg5: memref<1x128xf32, #tpu.memory_space<vmem>>, %arg6: memref<128x128xf32, #tpu.memory_space<vmem>>, %arg7: memref<1x128xf32, #tpu.memory_space<vmem>>, %arg8: memref<304x128xf32, #tpu.memory_space<vmem>>) attributes {dimension_semantics = [#tpu.dimension_semantics<parallel>], iteration_bounds = array<i64: 1>, scalar_prefetch = 0 : i64, scratch_operands = 0 : i64, tpu.core_type = #tpu.core_type<tc>, window_params = [{transform_indices = @transform_0, window_bounds = array<i64: 304, 32>}, {pipeline_mode = #tpu.pipeline_mode<synchronous>, transform_indices = @transform_1, window_bounds = array<i64: 32, 128>}, {pipeline_mode = #tpu.pipeline_mode<synchronous>, transform_indices = @transform_2, window_bounds = array<i64: 1, 128>}, {pipeline_mode = #tpu.pipeline_mode<synchronous>, transform_indices = @transform_3, window_bounds = array<i64: 128, 128>}, {pipeline_mode = #tpu.pipeline_mode<synchronous>, transform_indices = @transform_4, window_bounds = array<i64: 1, 128>}, {pipeline_mode = #tpu.pipeline_mode<synchronous>, transform_indices = @transform_5, window_bounds = array<i64: 128, 128>}, {pipeline_mode = #tpu.pipeline_mode<synchronous>, transform_indices = @transform_6, window_bounds = array<i64: 1, 128>}, {transform_indices = @transform_7, window_bounds = array<i64: 304, 128>}]} {
    %c0 = arith.constant 0 : index
    %c0_0 = arith.constant 0 : index
    %0 = vector.load %arg1[%c0, %c0_0] : memref<304x32xf32, #tpu.memory_space<vmem>>, vector<304x32xf32>
    %c0_1 = arith.constant 0 : index
    %c0_2 = arith.constant 0 : index
    %1 = vector.load %arg2[%c0_1, %c0_2] : memref<32x128xf32, #tpu.memory_space<vmem>>, vector<32x128xf32>
    %c0_3 = arith.constant 0 : index
    %c0_4 = arith.constant 0 : index
    %2 = vector.load %arg3[%c0_3, %c0_4] : memref<1x128xf32, #tpu.memory_space<vmem>>, vector<1x128xf32>
    %cst = arith.constant dense<0.000000e+00> : vector<304x128xf32>
    %3 = tpu.matmul %0, %1, %cst {dimension_numbers = #tpu.dot_dimension_numbers<[1], [0], [0], [1], [0, 0, 1, 1], [], []>} : vector<304x32xf32>, vector<32x128xf32>, vector<304x128xf32> -> vector<304x128xf32>
    %4 = vector.broadcast %2 : vector<1x128xf32> to vector<304x128xf32>
    %5 = arith.addf %3, %4 : vector<304x128xf32>
    %cst_5 = arith.constant 0.000000e+00 : f32
    %6 = vector.broadcast %cst_5 : f32 to vector<304x128xf32>
    %7 = arith.maximumf %5, %6 : vector<304x128xf32>
    %c0_6 = arith.constant 0 : index
    %c0_7 = arith.constant 0 : index
    %8 = vector.load %arg4[%c0_6, %c0_7] : memref<128x128xf32, #tpu.memory_space<vmem>>, vector<128x128xf32>
    %c0_8 = arith.constant 0 : index
    %c0_9 = arith.constant 0 : index
    %9 = vector.load %arg5[%c0_8, %c0_9] : memref<1x128xf32, #tpu.memory_space<vmem>>, vector<1x128xf32>
    %cst_10 = arith.constant dense<0.000000e+00> : vector<304x128xf32>
    %10 = tpu.matmul %7, %8, %cst_10 {dimension_numbers = #tpu.dot_dimension_numbers<[1], [0], [0], [1], [0, 0, 1, 1], [], []>} : vector<304x128xf32>, vector<128x128xf32>, vector<304x128xf32> -> vector<304x128xf32>
    %11 = vector.broadcast %9 : vector<1x128xf32> to vector<304x128xf32>
    %12 = arith.addf %10, %11 : vector<304x128xf32>
    %cst_11 = arith.constant 0.000000e+00 : f32
    %13 = vector.broadcast %cst_11 : f32 to vector<304x128xf32>
    %14 = arith.maximumf %12, %13 : vector<304x128xf32>
    %c0_12 = arith.constant 0 : index
    %c0_13 = arith.constant 0 : index
    %15 = vector.load %arg6[%c0_12, %c0_13] : memref<128x128xf32, #tpu.memory_space<vmem>>, vector<128x128xf32>
    %c0_14 = arith.constant 0 : index
    %c0_15 = arith.constant 0 : index
    %16 = vector.load %arg7[%c0_14, %c0_15] : memref<1x128xf32, #tpu.memory_space<vmem>>, vector<1x128xf32>
    %cst_16 = arith.constant dense<0.000000e+00> : vector<304x128xf32>
    %17 = tpu.matmul %14, %15, %cst_16 {dimension_numbers = #tpu.dot_dimension_numbers<[1], [0], [0], [1], [0, 0, 1, 1], [], []>} : vector<304x128xf32>, vector<128x128xf32>, vector<304x128xf32> -> vector<304x128xf32>
    %18 = vector.broadcast %16 : vector<1x128xf32> to vector<304x128xf32>
    %19 = arith.addf %17, %18 : vector<304x128xf32>
    %c0_17 = arith.constant 0 : index
    %c0_18 = arith.constant 0 : index
    %20 = vector.load %arg8[%c0_17, %c0_18] : memref<304x128xf32, #tpu.memory_space<vmem>>, vector<304x128xf32>
    tpu.vector_store %arg8[%c0_17, %c0_18], %19 {strides = array<i32>} : memref<304x128xf32, #tpu.memory_space<vmem>>, vector<304x128xf32>,
    return
  }
  func.func @transform_0(%arg0: i32) -> (i32, i32) {
    %c0_i32 = arith.constant 0 : i32
    %c0_i32_0 = arith.constant 0 : i32
    return %arg0, %c0_i32 : i32, i32
  }
  func.func @transform_1(%arg0: i32) -> (i32, i32) {
    %c0_i32 = arith.constant 0 : i32
    %c0_i32_0 = arith.constant 0 : i32
    %c0_i32_1 = arith.constant 0 : i32
    return %c0_i32, %c0_i32_0 : i32, i32
  }
  func.func @transform_2(%arg0: i32) -> (i32, i32) {
    %c0_i32 = arith.constant 0 : i32
    %c0_i32_0 = arith.constant 0 : i32
    %c0_i32_1 = arith.constant 0 : i32
    return %c0_i32, %c0_i32_0 : i32, i32
  }
  func.func @transform_3(%arg0: i32) -> (i32, i32) {
    %c0_i32 = arith.constant 0 : i32
    %c0_i32_0 = arith.constant 0 : i32
    %c0_i32_1 = arith.constant 0 : i32
    return %c0_i32, %c0_i32_0 : i32, i32
  }
  func.func @transform_4(%arg0: i32) -> (i32, i32) {
    %c0_i32 = arith.constant 0 : i32
    %c0_i32_0 = arith.constant 0 : i32
    %c0_i32_1 = arith.constant 0 : i32
    return %c0_i32, %c0_i32_0 : i32, i32
  }
  func.func @transform_5(%arg0: i32) -> (i32, i32) {
    %c0_i32 = arith.constant 0 : i32
    %c0_i32_0 = arith.constant 0 : i32
    %c0_i32_1 = arith.constant 0 : i32
    return %c0_i32, %c0_i32_0 : i32, i32
  }
  func.func @transform_6(%arg0: i32) -> (i32, i32) {
    %c0_i32 = arith.constant 0 : i32
    %c0_i32_0 = arith.constant 0 : i32
    %c0_i32_1 = arith.constant 0 : i32
    return %c0_i32, %c0_i32_0 : i32, i32
  }
  func.func @transform_7(%arg0: i32) -> (i32, i32) {
    %c0_i32 = arith.constant 0 : i32
    %c0_i32_0 = arith.constant 0 : i32
    return %arg0, %c0_i32 : i32, i32
  }
}

</mosaic_0001>

<llo_original>
// kernel: _decoder_forward_impl.1
$region0: #{_decoder_forward_impl.1}
  #allocation0 [shape = 'u32[]', space=smem, size = 0x4, offset = 0x4, fixed_abs, tag = 'smem constant byte address 0x4 - core index']
  #allocation1 [shape = 'u32[144,128]{1,0:T(1,128)}', space=vmem, size = 0x12000, scoped, tag = 'internal scratch']
  %s0 = inlined_call_operand.vmem [shape: f32[304,32], index: 0, kind: input, shape index: {}]
  %s1 = inlined_call_operand.vmem [shape: f32[32,128], index: 1, kind: input, shape index: {}]
  %s2 = inlined_call_operand.vmem [shape: f32[1,128], index: 2, kind: input, shape index: {}]
  %s3 = inlined_call_operand.vmem [shape: f32[128,128], index: 3, kind: input, shape index: {}]
  %s4 = inlined_call_operand.vmem [shape: f32[1,128], index: 4, kind: input, shape index: {}]
  %s5 = inlined_call_operand.vmem [shape: f32[128,128], index: 5, kind: input, shape index: {}]
  %s6 = inlined_call_operand.vmem [shape: f32[1,128], index: 6, kind: input, shape index: {}]
  %s7 = inlined_call_operand.vmem [shape: f32[304,128], index: 7, kind: output, shape index: {}]
  %s8 = sld [smem:[#allocation0]]
  $region38: #{_decoder_forward_impl.1} parent=0
    _
  %s10 = ssub.s32 1, %s8
  %s11 = scalar_select 0, %s10, %s8
  // Predicated region
  $region2: #{_decoder_forward_impl.1} parent=0 // pred_check
    _
  $region3: #{_decoder_forward_impl.1} parent=0 // pred_check_branch
    %13 = sbr.rel (0) target = $region5
  $region4: #{_decoder_forward_impl.1} parent=0 // pred_region
    _
  $region5: #{_decoder_forward_impl.1} parent=0 // pred_fallthru
    _
  // Predicated region
  $region6: #{_decoder_forward_impl.1} parent=0 // pred_check
    _
  $region7: #{_decoder_forward_impl.1} parent=0 // pred_check_branch
    %15 = sbr.rel (0) target = $region9
  $region8: #{_decoder_forward_impl.1} parent=0 // pred_region
    _
  $region9: #{_decoder_forward_impl.1} parent=0 // pred_fallthru
    _
  // Predicated region
  $region10: #{_decoder_forward_impl.1} parent=0 // pred_check
    _
  $region11: #{_decoder_forward_impl.1} parent=0 // pred_check_branch
    %17 = sbr.rel (0) target = $region13
  $region12: #{_decoder_forward_impl.1} parent=0 // pred_region
    _
  $region13: #{_decoder_forward_impl.1} parent=0 // pred_fallthru
    _
  // Predicated region
  $region14: #{_decoder_forward_impl.1} parent=0 // pred_check
    _
  $region15: #{_decoder_forward_impl.1} parent=0 // pred_check_branch
    %19 = sbr.rel (0) target = $region17
  $region16: #{_decoder_forward_impl.1} parent=0 // pred_region
    _
  $region17: #{_decoder_forward_impl.1} parent=0 // pred_fallthru
    _
  // Predicated region
  $region18: #{_decoder_forward_impl.1} parent=0 // pred_check
    _
  $region19: #{_decoder_forward_impl.1} parent=0 // pred_check_branch
    %21 = sbr.rel (0) target = $region21
  $region20: #{_decoder_forward_impl.1} parent=0 // pred_region
    _
  $region21: #{_decoder_forward_impl.1} parent=0 // pred_fallthru
    _
  // Predicated region
  $region22: #{_decoder_forward_impl.1} parent=0 // pred_check
    _
  $region23: #{_decoder_forward_impl.1} parent=0 // pred_check_branch
    %23 = sbr.rel (0) target = $region25
  $region24: #{_decoder_forward_impl.1} parent=0 // pred_region
    _
  $region25: #{_decoder_forward_impl.1} parent=0 // pred_fallthru
    _
  // Predicated region
  $region26: #{_decoder_forward_impl.1} parent=0 // pred_check
    _
  $region27: #{_decoder_forward_impl.1} parent=0 // pred_check_branch
    %25 = sbr.rel (0) target = $region29
  $region28: #{_decoder_forward_impl.1} parent=0 // pred_region
    _
  $region29: #{_decoder_forward_impl.1} parent=0 // pred_fallthru
    _
  %v26 = vld [vmem:[%s0] sm:$0xff]
  %v27 = vld [vmem:[%s0 + $0x8] sm:$0xff]
  %v28 = vld [vmem:[%s0 + $0x10] sm:$0xff]
  %v29 = vld [vmem:[%s0 + $0x18] sm:$0xff]
  %v30 = vld [vmem:[%s0 + $0x20] sm:$0xff]
  %v31 = vld [vmem:[%s0 + $0x28] sm:$0xff]
  %v32 = vld [vmem:[%s0 + $0x30] sm:$0xff]
  %v33 = vld [vmem:[%s0 + $0x38] sm:$0xff]
  %v34 = vld [vmem:[%s0 + $0x40] sm:$0xff]
  %v35 = vld [vmem:[%s0 + $0x48] sm:$0xff]
  %v36 = vld [vmem:[%s0 + $0x50] sm:$0xff]
  %v37 = vld [vmem:[%s0 + $0x58] sm:$0xff]
  %v38 = vld [vmem:[%s0 + $0x60] sm:$0xff]
  %v39 = vld [vmem:[%s0 + $0x68] sm:$0xff]
  %v40 = vld [vmem:[%s0 + $0x70] sm:$0xff]
  %v41 = vld [vmem:[%s0 + $0x78] sm:$0xff]
  %v42 = vld [vmem:[%s0 + $0x80] sm:$0xff]
  %v43 = vld [vmem:[%s0 + $0x88] sm:$0xff]
  %v44 = vld [vmem:[%s0 + $0x90] sm:$0xff]
  %v45 = vld [vmem:[%s0 + $0x98] sm:$0xff]
  %v46 = vld [vmem:[%s0 + $0xa0] sm:$0xff]
  %v47 = vld [vmem:[%s0 + $0xa8] sm:$0xff]
  %v48 = vld [vmem:[%s0 + $0xb0] sm:$0xff]
  %v49 = vld [vmem:[%s0 + $0xb8] sm:$0xff]
  %v50 = vld [vmem:[%s0 + $0xc0] sm:$0xff]
  %v51 = vld [vmem:[%s0 + $0xc8] sm:$0xff]
  %v52 = vld [vmem:[%s0 + $0xd0] sm:$0xff]
  %v53 = vld [vmem:[%s0 + $0xd8] sm:$0xff]
  %v54 = vld [vmem:[%s0 + $0xe0] sm:$0xff]
  %v55 = vld [vmem:[%s0 + $0xe8] sm:$0xff]
  %v56 = vld [vmem:[%s0 + $0xf0] sm:$0xff]
  %v57 = vld [vmem:[%s0 + $0xf8] sm:$0xff]
  %v58 = vld [vmem:[%s0 + $0x100] sm:$0xff]
  %v59 = vld [vmem:[%s0 + $0x108] sm:$0xff]
  %v60 = vld [vmem:[%s0 + $0x110] sm:$0xff]
  %v61 = vld [vmem:[%s0 + $0x118] sm:$0xff]
  %v62 = vld [vmem:[%s0 + $0x120] sm:$0xff]
  %v63 = vld [vmem:[%s0 + $0x128] sm:$0xff]
  %v64 = vld [vmem:[%s1] sm:$0xff]
  %v65 = vld [vmem:[%s1 + $0x8] sm:$0xff]
  %v66 = vld [vmem:[%s1 + $0x10] sm:$0xff]
  %v67 = vld [vmem:[%s1 + $0x18] sm:$0xff]
  %v68 = vld [vmem:[%s2] sm:$0x1]
  %v70 = vlaneseq
  %v71 = vshrl.u32 %v70, 7
  %v72 = vsub.s32 0, %v71
  %v73 = vrot.slane %v68, %v72
  %vm75 = vcmask 261120
  %v77 = vsel %vm75, %v26, 0
  %v80 = vsel %vm75, %v27, 0
  %v83 = vsel %vm75, %v28, 0
  %v86 = vsel %vm75, %v29, 0
  %v89 = vsel %vm75, %v30, 0
  %v92 = vsel %vm75, %v31, 0
  %v95 = vsel %vm75, %v32, 0
  %v98 = vsel %vm75, %v33, 0
  %v101 = vsel %vm75, %v34, 0
  %v104 = vsel %vm75, %v35, 0
  %v107 = vsel %vm75, %v36, 0
  %v110 = vsel %vm75, %v37, 0
  %v113 = vsel %vm75, %v38, 0
  %v116 = vsel %vm75, %v39, 0
  %v119 = vsel %vm75, %v40, 0
  %v122 = vsel %vm75, %v41, 0
  %v125 = vsel %vm75, %v42, 0
  %v128 = vsel %vm75, %v43, 0
  %v131 = vsel %vm75, %v44, 0
  %v134 = vsel %vm75, %v45, 0
  %v137 = vsel %vm75, %v46, 0
  %v140 = vsel %vm75, %v47, 0
  %v143 = vsel %vm75, %v48, 0
  %v146 = vsel %vm75, %v49, 0
  %v149 = vsel %vm75, %v50, 0
  %v152 = vsel %vm75, %v51, 0
  %v155 = vsel %vm75, %v52, 0
  %v158 = vsel %vm75, %v53, 0
  %v161 = vsel %vm75, %v54, 0
  %v164 = vsel %vm75, %v55, 0
  %v167 = vsel %vm75, %v56, 0
  %v170 = vsel %vm75, %v57, 0
  %v173 = vsel %vm75, %v58, 0
  %v176 = vsel %vm75, %v59, 0
  %v179 = vsel %vm75, %v60, 0
  %v182 = vsel %vm75, %v61, 0
  %v185 = vsel %vm75, %v62, 0
  %v188 = vsel %vm75, %v63, 0
  %190 = vmatprep.subr.mxu0 0.0
  %191 = vmatpush1.msra.mxu0 %v64
  %192 = vmatprep.subr.mxu0 0.0
  %193 = vmatpush1.msra.mxu0 %v65
  %194 = vmatprep.subr.mxu0 0.0
  %195 = vmatpush1.msra.mxu0 %v66
  %196 = vmatprep.subr.mxu0 0.0
  %197 = vmatpush1.msra.mxu0 %v67
  %198 = vmatprep.subr.mxu0 0.0
  %199 = vmatpush1.msra.mxu0 0.0
  %200 = vmatprep.subr.mxu0 0.0
  %201 = vmatpush1.msra.mxu0 0.0
  %202 = vmatprep.subr.mxu0 0.0
  %203 = vmatpush1.msra.mxu0 0.0
  %204 = vmatprep.subr.mxu0 0.0
  %205 = vmatpush1.msra.mxu0 0.0
  %206 = vmatprep.subr.mxu0 0.0
  %207 = vmatpush1.msra.mxu0 0.0
  %208 = vmatprep.subr.mxu0 0.0
  %209 = vmatpush1.msra.mxu0 0.0
  %210 = vmatprep.subr.mxu0 0.0
  %211 = vmatpush1.msra.mxu0 0.0
  %212 = vmatprep.subr.mxu0 0.0
  %213 = vmatpush1.msra.mxu0 0.0
  %214 = vmatprep.subr.mxu0 0.0
  %215 = vmatpush1.msra.mxu0 0.0
  %216 = vmatprep.subr.mxu0 0.0
  %217 = vmatpush1.msra.mxu0 0.0
  %218 = vmatprep.subr.mxu0 0.0
  %219 = vmatpush1.msra.mxu0 0.0
  %220 = vmatprep.subr.mxu0 0.0
  %221 = vmatpush1.msra.mxu0 0.0
  %222 = vmatprep.subr.mxu0 0.0
  %223 = vmatpush1.msra.mxu0 0.0
  %224 = vmatprep.subr.mxu0 0.0
  %225 = vmatpush1.msra.mxu0 0.0
  %226 = vmatprep.subr.mxu0 0.0
  %227 = vmatpush1.msra.mxu0 0.0
  %228 = vmatprep.subr.mxu0 0.0
  %229 = vmatpush1.msra.mxu0 0.0
  %230 = vmatprep.subr.mxu0 0.0
  %231 = vmatpush1.msra.mxu0 0.0
  %232 = vmatprep.subr.mxu0 0.0
  %233 = vmatpush1.msra.mxu0 0.0
  %234 = vmatprep.subr.mxu0 0.0
  %235 = vmatpush1.msra.mxu0 0.0
  %236 = vmatprep.subr.mxu0 0.0
  %237 = vmatpush1.msra.mxu0 0.0
  %238 = vmatprep.subr.mxu0 0.0
  %239 = vmatpush1.msra.mxu0 0.0
  %240 = vmatprep.subr.mxu0 0.0
  %241 = vmatpush1.msra.mxu0 0.0
  %242 = vmatprep.subr.mxu0 0.0
  %243 = vmatpush1.msra.mxu0 0.0
  %244 = vmatprep.subr.mxu0 0.0
  %245 = vmatpush1.msra.mxu0 0.0
  %246 = vmatprep.subr.mxu0 0.0
  %247 = vmatpush1.msra.mxu0 0.0
  %248 = vmatprep.subr.mxu0 0.0
  %249 = vmatpush1.msra.mxu0 0.0
  %250 = vmatprep.subr.mxu0 0.0
  %251 = vmatpush1.msra.mxu0 0.0
  %252 = vmatprep.subr.mxu0 0.0
  %253 = vmatpush1.msra.mxu0 0.0
  %254 = vmatprep.mubr.f32.mxu0 0.0
  %255 = vmatmul.mubr.f32.gmra.mrb[0].mxu0 %v77
  %v256 = vpop.f32.mrb[0].mxu0
  %v257 = vadd.f32 %v73, %v256
  %v258 = vpop.f32.mrb[0].mxu0
  %259 = vmatprep.mubr.f32.mxu0 0.0
  %260 = vmatmul.mubr.f32.gmra.mrb[0].mxu0 %v80
  %v261 = vpop.f32.mrb[0].mxu0
  %v262 = vadd.f32 %v73, %v261
  %v263 = vpop.f32.mrb[0].mxu0
  %264 = vmatprep.mubr.f32.mxu0 0.0
  %265 = vmatmul.mubr.f32.gmra.mrb[0].mxu0 %v83
  %v266 = vpop.f32.mrb[0].mxu0
  %v267 = vadd.f32 %v73, %v266
  %v268 = vpop.f32.mrb[0].mxu0
  %269 = vmatprep.mubr.f32.mxu0 0.0
  %270 = vmatmul.mubr.f32.gmra.mrb[0].mxu0 %v86
  %v271 = vpop.f32.mrb[0].mxu0
  %v272 = vadd.f32 %v73, %v271
  %v273 = vpop.f32.mrb[0].mxu0
  %274 = vmatprep.mubr.f32.mxu0 0.0
  %275 = vmatmul.mubr.f32.gmra.mrb[0].mxu0 %v89
  %v276 = vpop.f32.mrb[0].mxu0
  %v277 = vadd.f32 %v73, %v276
  %v278 = vpop.f32.mrb[0].mxu0
  %279 = vmatprep.mubr.f32.mxu0 0.0
  %280 = vmatmul.mubr.f32.gmra.mrb[0].mxu0 %v92
  %v281 = vpop.f32.mrb[0].mxu0
  %v282 = vadd.f32 %v73, %v281
  %v283 = vpop.f32.mrb[0].mxu0
  %284 = vmatprep.mubr.f32.mxu0 0.0
  %285 = vmatmul.mubr.f32.gmra.mrb[0].mxu0 %v95
  %v286 = vpop.f32.mrb[0].mxu0
  %v287 = vadd.f32 %v73, %v286
  %v288 = vpop.f32.mrb[0].mxu0
  %289 = vmatprep.mubr.f32.mxu0 0.0
  %290 = vmatmul.mubr.f32.gmra.mrb[0].mxu0 %v98
  %v291 = vpop.f32.mrb[0].mxu0
  %v292 = vadd.f32 %v73, %v291
  %v293 = vpop.f32.mrb[0].mxu0
  %294 = vmatprep.mubr.f32.mxu0 0.0
  %295 = vmatmul.mubr.f32.gmra.mrb[0].mxu0 %v101
  %v296 = vpop.f32.mrb[0].mxu0
  %v297 = vadd.f32 %v73, %v296
  %v298 = vpop.f32.mrb[0].mxu0
  %299 = vmatprep.mubr.f32.mxu0 0.0
  %300 = vmatmul.mubr.f32.gmra.mrb[0].mxu0 %v104
  %v301 = vpop.f32.mrb[0].mxu0
  %v302 = vadd.f32 %v73, %v301
  %v303 = vpop.f32.mrb[0].mxu0
  %304 = vmatprep.mubr.f32.mxu0 0.0
  %305 = vmatmul.mubr.f32.gmra.mrb[0].mxu0 %v107
  %v306 = vpop.f32.mrb[0].mxu0
  %v307 = vadd.f32 %v73, %v306
  %v308 = vpop.f32.mrb[0].mxu0
  %309 = vmatprep.mubr.f32.mxu0 0.0
  %310 = vmatmul.mubr.f32.gmra.mrb[0].mxu0 %v110
  %v311 = vpop.f32.mrb[0].mxu0
  %v312 = vadd.f32 %v73, %v311
  %v313 = vpop.f32.mrb[0].mxu0
  %314 = vmatprep.mubr.f32.mxu0 0.0
  %315 = vmatmul.mubr.f32.gmra.mrb[0].mxu0 %v113
  %v316 = vpop.f32.mrb[0].mxu0
  %v317 = vadd.f32 %v73, %v316
  %v318 = vpop.f32.mrb[0].mxu0
  %319 = vmatprep.mubr.f32.mxu0 0.0
  %320 = vmatmul.mubr.f32.gmra.mrb[0].mxu0 %v116
  %v321 = vpop.f32.mrb[0].mxu0
  %v322 = vadd.f32 %v73, %v321
  %v323 = vpop.f32.mrb[0].mxu0
  %324 = vmatprep.mubr.f32.mxu0 0.0
  %325 = vmatmul.mubr.f32.gmra.mrb[0].mxu0 %v119
  %v326 = vpop.f32.mrb[0].mxu0
  %v327 = vadd.f32 %v73, %v326
  %v328 = vpop.f32.mrb[0].mxu0
  %329 = vmatprep.mubr.f32.mxu0 0.0
  %330 = vmatmul.mubr.f32.gmra.mrb[0].mxu0 %v122
  %v331 = vpop.f32.mrb[0].mxu0
  %v332 = vadd.f32 %v73, %v331
  %v333 = vpop.f32.mrb[0].mxu0
  %334 = vmatprep.mubr.f32.mxu0 0.0
  %335 = vmatmul.mubr.f32.gmra.mrb[0].mxu0 %v125
  %v336 = vpop.f32.mrb[0].mxu0
  %v337 = vadd.f32 %v73, %v336
  %v338 = vpop.f32.mrb[0].mxu0
  %339 = vmatprep.mubr.f32.mxu0 0.0
  %340 = vmatmul.mubr.f32.gmra.mrb[0].mxu0 %v128
  %v341 = vpop.f32.mrb[0].mxu0
  %v342 = vadd.f32 %v73, %v341
  %v343 = vpop.f32.mrb[0].mxu0
  %344 = vmatprep.mubr.f32.mxu0 0.0
  %345 = vmatmul.mubr.f32.gmra.mrb[0].mxu0 %v131
  %v346 = vpop.f32.mrb[0].mxu0
  %v347 = vadd.f32 %v73, %v346
  %v348 = vpop.f32.mrb[0].mxu0
  %349 = vmatprep.mubr.f32.mxu0 0.0
  %350 = vmatmul.mubr.f32.gmra.mrb[0].mxu0 %v134
  %v351 = vpop.f32.mrb[0].mxu0
  %v352 = vadd.f32 %v73, %v351
  %v353 = vpop.f32.mrb[0].mxu0
  %354 = vmatprep.mubr.f32.mxu0 0.0
  %355 = vmatmul.mubr.f32.gmra.mrb[0].mxu0 %v137
  %v356 = vpop.f32.mrb[0].mxu0
  %v357 = vadd.f32 %v73, %v356
  %v358 = vpop.f32.mrb[0].mxu0
  %359 = vmatprep.mubr.f32.mxu0 0.0
  %360 = vmatmul.mubr.f32.gmra.mrb[0].mxu0 %v140
  %v361 = vpop.f32.mrb[0].mxu0
  %v362 = vadd.f32 %v73, %v361
  %v363 = vpop.f32.mrb[0].mxu0
  %364 = vmatprep.mubr.f32.mxu0 0.0
  %365 = vmatmul.mubr.f32.gmra.mrb[0].mxu0 %v143
  %v366 = vpop.f32.mrb[0].mxu0
  %v367 = vadd.f32 %v73, %v366
  %v368 = vpop.f32.mrb[0].mxu0
  %369 = vmatprep.mubr.f32.mxu0 0.0
  %370 = vmatmul.mubr.f32.gmra.mrb[0].mxu0 %v146
  %v371 = vpop.f32.mrb[0].mxu0
  %v372 = vadd.f32 %v73, %v371
  %v373 = vpop.f32.mrb[0].mxu0
  %374 = vmatprep.mubr.f32.mxu0 0.0
  %375 = vmatmul.mubr.f32.gmra.mrb[0].mxu0 %v149
  %v376 = vpop.f32.mrb[0].mxu0
  %v377 = vadd.f32 %v73, %v376
  %v378 = vpop.f32.mrb[0].mxu0
  %379 = vmatprep.mubr.f32.mxu0 0.0
  %380 = vmatmul.mubr.f32.gmra.mrb[0].mxu0 %v152
  %v381 = vpop.f32.mrb[0].mxu0
  %v382 = vadd.f32 %v73, %v381
  %v383 = vpop.f32.mrb[0].mxu0
  %384 = vmatprep.mubr.f32.mxu0 0.0
  %385 = vmatmul.mubr.f32.gmra.mrb[0].mxu0 %v155
  %v386 = vpop.f32.mrb[0].mxu0
  %v387 = vadd.f32 %v73, %v386
  %v388 = vpop.f32.mrb[0].mxu0
  %389 = vmatprep.mubr.f32.mxu0 0.0
  %390 = vmatmul.mubr.f32.gmra.mrb[0].mxu0 %v158
  %v391 = vpop.f32.mrb[0].mxu0
  %v392 = vadd.f32 %v73, %v391
  %v393 = vpop.f32.mrb[0].mxu0
  %394 = vmatprep.mubr.f32.mxu0 0.0
  %395 = vmatmul.mubr.f32.gmra.mrb[0].mxu0 %v161
  %v396 = vpop.f32.mrb[0].mxu0
  %v397 = vadd.f32 %v73, %v396
  %v398 = vpop.f32.mrb[0].mxu0
  %399 = vmatprep.mubr.f32.mxu0 0.0
  %400 = vmatmul.mubr.f32.gmra.mrb[0].mxu0 %v164
  %v401 = vpop.f32.mrb[0].mxu0
  %v402 = vadd.f32 %v73, %v401
  %v403 = vpop.f32.mrb[0].mxu0
  %404 = vmatprep.mubr.f32.mxu0 0.0
  %405 = vmatmul.mubr.f32.gmra.mrb[0].mxu0 %v167
  %v406 = vpop.f32.mrb[0].mxu0
  %v407 = vadd.f32 %v73, %v406
  %v408 = vpop.f32.mrb[0].mxu0
  %409 = vmatprep.mubr.f32.mxu0 0.0
  %410 = vmatmul.mubr.f32.gmra.mrb[0].mxu0 %v170
  %v411 = vpop.f32.mrb[0].mxu0
  %v412 = vadd.f32 %v73, %v411
  %v413 = vpop.f32.mrb[0].mxu0
  %414 = vmatprep.mubr.f32.mxu0 0.0
  %415 = vmatmul.mubr.f32.gmra.mrb[0].mxu0 %v173
  %v416 = vpop.f32.mrb[0].mxu0
  %v417 = vadd.f32 %v73, %v416
  %v418 = vpop.f32.mrb[0].mxu0
  %419 = vmatprep.mubr.f32.mxu0 0.0
  %420 = vmatmul.mubr.f32.gmra.mrb[0].mxu0 %v176
  %v421 = vpop.f32.mrb[0].mxu0
  %v422 = vadd.f32 %v73, %v421
  %v423 = vpop.f32.mrb[0].mxu0
  %424 = vmatprep.mubr.f32.mxu0 0.0
  %425 = vmatmul.mubr.f32.gmra.mrb[0].mxu0 %v179
  %v426 = vpop.f32.mrb[0].mxu0
  %v427 = vadd.f32 %v73, %v426
  %v428 = vpop.f32.mrb[0].mxu0
  %429 = vmatprep.mubr.f32.mxu0 0.0
  %430 = vmatmul.mubr.f32.gmra.mrb[0].mxu0 %v182
  %v431 = vpop.f32.mrb[0].mxu0
  %v432 = vadd.f32 %v73, %v431
  %v433 = vpop.f32.mrb[0].mxu0
  %434 = vmatprep.mubr.f32.mxu0 0.0
  %435 = vmatmul.mubr.f32.gmra.mrb[0].mxu0 %v185
  %v436 = vpop.f32.mrb[0].mxu0
  %v437 = vadd.f32 %v73, %v436
  %v438 = vpop.f32.mrb[0].mxu0
  %439 = vmatprep.mubr.f32.mxu0 0.0
  %440 = vmatmul.mubr.f32.gmra.mrb[0].mxu0 %v188
  %v441 = vpop.f32.mrb[0].mxu0
  %v442 = vadd.f32 %v73, %v441
  %v443 = vpop.f32.mrb[0].mxu0
  %444 = vdwg.mxu0
  %v445 = vmax.f32 %v257, 0.0
  %v446 = vmax.f32 %v262, 0.0
  %v447 = vmax.f32 %v267, 0.0
  %v448 = vmax.f32 %v272, 0.0
  %v449 = vmax.f32 %v277, 0.0
  %v450 = vmax.f32 %v282, 0.0
  %v451 = vmax.f32 %v287, 0.0
  %v452 = vmax.f32 %v292, 0.0
  %v453 = vmax.f32 %v297, 0.0
  %v454 = vmax.f32 %v302, 0.0
  %v455 = vmax.f32 %v307, 0.0
  %v456 = vmax.f32 %v312, 0.0
  %v457 = vmax.f32 %v317, 0.0
  %v458 = vmax.f32 %v322, 0.0
  %v459 = vmax.f32 %v327, 0.0
  %v460 = vmax.f32 %v332, 0.0
  %v461 = vmax.f32 %v337, 0.0
  %v462 = vmax.f32 %v342, 0.0
  %v463 = vmax.f32 %v347, 0.0
  %v464 = vmax.f32 %v352, 0.0
  %v465 = vmax.f32 %v357, 0.0
  %v466 = vmax.f32 %v362, 0.0
  %v467 = vmax.f32 %v367, 0.0
  %v468 = vmax.f32 %v372, 0.0
  %v469 = vmax.f32 %v377, 0.0
  %v470 = vmax.f32 %v382, 0.0
  %v471 = vmax.f32 %v387, 0.0
  %v472 = vmax.f32 %v392, 0.0
  %v473 = vmax.f32 %v397, 0.0
  %v474 = vmax.f32 %v402, 0.0
  %v475 = vmax.f32 %v407, 0.0
  %v476 = vmax.f32 %v412, 0.0
  %v477 = vmax.f32 %v417, 0.0
  %v478 = vmax.f32 %v422, 0.0
  %v479 = vmax.f32 %v427, 0.0
  %v480 = vmax.f32 %v432, 0.0
  %v481 = vmax.f32 %v437, 0.0
  %v482 = vmax.f32 %v442, 0.0
  %v483 = vld [vmem:[%s3] sm:$0xff]
  %v484 = vld [vmem:[%s3 + $0x8] sm:$0xff]
  %v485 = vld [vmem:[%s3 + $0x10] sm:$0xff]
  %v486 = vld [vmem:[%s3 + $0x18] sm:$0xff]
  %v487 = vld [vmem:[%s3 + $0x20] sm:$0xff]
  %v488 = vld [vmem:[%s3 + $0x28] sm:$0xff]
  %v489 = vld [vmem:[%s3 + $0x30] sm:$0xff]
  %v490 = vld [vmem:[%s3 + $0x38] sm:$0xff]
  %v491 = vld [vmem:[%s3 + $0x40] sm:$0xff]
  %v492 = vld [vmem:[%s3 + $0x48] sm:$0xff]
  %v493 = vld [vmem:[%s3 + $0x50] sm:$0xff]
  %v494 = vld [vmem:[%s3 + $0x58] sm:$0xff]
  %v495 = vld [vmem:[%s3 + $0x60] sm:$0xff]
  %v496 = vld [vmem:[%s3 + $0x68] sm:$0xff]
  %v497 = vld [vmem:[%s3 + $0x70] sm:$0xff]
  %v498 = vld [vmem:[%s3 + $0x78] sm:$0xff]
  %v499 = vld [vmem:[%s4] sm:$0x1]
  %v501 = vlaneseq
  %v502 = vshrl.u32 %v501, 7
  %v503 = vsub.s32 0, %v502
  %v504 = vrot.slane %v499, %v503
  %506 = vmatprep.subr.mxu0 0.0
  %507 = vmatpush1.msra.mxu0 %v483
  %508 = vmatprep.subr.mxu0 0.0
  %509 = vmatpush1.msra.mxu0 %v484
  %510 = vmatprep.subr.mxu0 0.0
  %511 = vmatpush1.msra.mxu0 %v485
  %512 = vmatprep.subr.mxu0 0.0
  %513 = vmatpush1.msra.mxu0 %v486
  %514 = vmatprep.subr.mxu0 0.0
  %515 = vmatpush1.msra.mxu0 %v487
  %516 = vmatprep.subr.mxu0 0.0
  %517 = vmatpush1.msra.mxu0 %v488
  %518 = vmatprep.subr.mxu0 0.0
  %519 = vmatpush1.msra.mxu0 %v489
  %520 = vmatprep.subr.mxu0 0.0
  %521 = vmatpush1.msra.mxu0 %v490
  %522 = vmatprep.subr.mxu0 0.0
  %523 = vmatpush1.msra.mxu0 %v491
  %524 = vmatprep.subr.mxu0 0.0
  %525 = vmatpush1.msra.mxu0 %v492
  %526 = vmatprep.subr.mxu0 0.0
  %527 = vmatpush1.msra.mxu0 %v493
  %528 = vmatprep.subr.mxu0 0.0
  %529 = vmatpush1.msra.mxu0 %v494
  %530 = vmatprep.subr.mxu0 0.0
  %531 = vmatpush1.msra.mxu0 %v495
  %532 = vmatprep.subr.mxu0 0.0
  %533 = vmatpush1.msra.mxu0 %v496
  %534 = vmatprep.subr.mxu0 0.0
  %535 = vmatpush1.msra.mxu0 %v497
  %536 = vmatprep.subr.mxu0 0.0
  %537 = vmatpush1.msra.mxu0 %v498
  %538 = vmatprep.subr.mxu0 0.0
  %539 = vmatpush1.msra.mxu0 0.0
  %540 = vmatprep.subr.mxu0 0.0
  %541 = vmatpush1.msra.mxu0 0.0
  %542 = vmatprep.subr.mxu0 0.0
  %543 = vmatpush1.msra.mxu0 0.0
  %544 = vmatprep.subr.mxu0 0.0
  %545 = vmatpush1.msra.mxu0 0.0
  %546 = vmatprep.subr.mxu0 0.0
  %547 = vmatpush1.msra.mxu0 0.0
  %548 = vmatprep.subr.mxu0 0.0
  %549 = vmatpush1.msra.mxu0 0.0
  %550 = vmatprep.subr.mxu0 0.0
  %551 = vmatpush1.msra.mxu0 0.0
  %552 = vmatprep.subr.mxu0 0.0
  %553 = vmatpush1.msra.mxu0 0.0
  %554 = vmatprep.subr.mxu0 0.0
  %555 = vmatpush1.msra.mxu0 0.0
  %556 = vmatprep.subr.mxu0 0.0
  %557 = vmatpush1.msra.mxu0 0.0
  %558 = vmatprep.subr.mxu0 0.0
  %559 = vmatpush1.msra.mxu0 0.0
  %560 = vmatprep.subr.mxu0 0.0
  %561 = vmatpush1.msra.mxu0 0.0
  %562 = vmatprep.subr.mxu0 0.0
  %563 = vmatpush1.msra.mxu0 0.0
  %564 = vmatprep.subr.mxu0 0.0
  %565 = vmatpush1.msra.mxu0 0.0
  %566 = vmatprep.subr.mxu0 0.0
  %567 = vmatpush1.msra.mxu0 0.0
  %568 = vmatprep.subr.mxu0 0.0
  %569 = vmatpush1.msra.mxu0 0.0
  %570 = vmatprep.mubr.f32.mxu0 0.0
  %571 = vmatmul.mubr.f32.gmra.mrb[0].mxu0 %v445
  %v572 = vpop.f32.mrb[0].mxu0
  %v573 = vadd.f32 %v504, %v572
  %v574 = vpop.f32.mrb[0].mxu0
  %575 = vmatprep.mubr.f32.mxu0 0.0
  %576 = vmatmul.mubr.f32.gmra.mrb[0].mxu0 %v446
  %v577 = vpop.f32.mrb[0].mxu0
  %v578 = vadd.f32 %v504, %v577
  %v579 = vpop.f32.mrb[0].mxu0
  %580 = vmatprep.mubr.f32.mxu0 0.0
  %581 = vmatmul.mubr.f32.gmra.mrb[0].mxu0 %v447
  %v582 = vpop.f32.mrb[0].mxu0
  %v583 = vadd.f32 %v504, %v582
  %v584 = vpop.f32.mrb[0].mxu0
  %585 = vmatprep.mubr.f32.mxu0 0.0
  %586 = vmatmul.mubr.f32.gmra.mrb[0].mxu0 %v448
  %v587 = vpop.f32.mrb[0].mxu0
  %v588 = vadd.f32 %v504, %v587
  %v589 = vpop.f32.mrb[0].mxu0
  %590 = vmatprep.mubr.f32.mxu0 0.0
  %591 = vmatmul.mubr.f32.gmra.mrb[0].mxu0 %v449
  %v592 = vpop.f32.mrb[0].mxu0
  %v593 = vadd.f32 %v504, %v592
  %v594 = vpop.f32.mrb[0].mxu0
  %595 = vmatprep.mubr.f32.mxu0 0.0
  %596 = vmatmul.mubr.f32.gmra.mrb[0].mxu0 %v450
  %v597 = vpop.f32.mrb[0].mxu0
  %v598 = vadd.f32 %v504, %v597
  %v599 = vpop.f32.mrb[0].mxu0
  %600 = vmatprep.mubr.f32.mxu0 0.0
  %601 = vmatmul.mubr.f32.gmra.mrb[0].mxu0 %v451
  %v602 = vpop.f32.mrb[0].mxu0
  %v603 = vadd.f32 %v504, %v602
  %v604 = vpop.f32.mrb[0].mxu0
  %605 = vmatprep.mubr.f32.mxu0 0.0
  %606 = vmatmul.mubr.f32.gmra.mrb[0].mxu0 %v452
  %v607 = vpop.f32.mrb[0].mxu0
  %v608 = vadd.f32 %v504, %v607
  %v609 = vpop.f32.mrb[0].mxu0
  %610 = vmatprep.mubr.f32.mxu0 0.0
  %611 = vmatmul.mubr.f32.gmra.mrb[0].mxu0 %v453
  %v612 = vpop.f32.mrb[0].mxu0
  %v613 = vadd.f32 %v504, %v612
  %v614 = vpop.f32.mrb[0].mxu0
  %615 = vmatprep.mubr.f32.mxu0 0.0
  %616 = vmatmul.mubr.f32.gmra.mrb[0].mxu0 %v454
  %v617 = vpop.f32.mrb[0].mxu0
  %v618 = vadd.f32 %v504, %v617
  %v619 = vpop.f32.mrb[0].mxu0
  %620 = vmatprep.mubr.f32.mxu0 0.0
  %621 = vmatmul.mubr.f32.gmra.mrb[0].mxu0 %v455
  %v622 = vpop.f32.mrb[0].mxu0
  %v623 = vadd.f32 %v504, %v622
  %v624 = vpop.f32.mrb[0].mxu0
  %625 = vmatprep.mubr.f32.mxu0 0.0
  %626 = vmatmul.mubr.f32.gmra.mrb[0].mxu0 %v456
  %v627 = vpop.f32.mrb[0].mxu0
  %v628 = vadd.f32 %v504, %v627
  %v629 = vpop.f32.mrb[0].mxu0
  %630 = vmatprep.mubr.f32.mxu0 0.0
  %631 = vmatmul.mubr.f32.gmra.mrb[0].mxu0 %v457
  %v632 = vpop.f32.mrb[0].mxu0
  %v633 = vadd.f32 %v504, %v632
  %v634 = vpop.f32.mrb[0].mxu0
  %635 = vmatprep.mubr.f32.mxu0 0.0
  %636 = vmatmul.mubr.f32.gmra.mrb[0].mxu0 %v458
  %v637 = vpop.f32.mrb[0].mxu0
  %v638 = vadd.f32 %v504, %v637
  %v639 = vpop.f32.mrb[0].mxu0
  %640 = vmatprep.mubr.f32.mxu0 0.0
  %641 = vmatmul.mubr.f32.gmra.mrb[0].mxu0 %v459
  %v642 = vpop.f32.mrb[0].mxu0
  %v643 = vadd.f32 %v504, %v642
  %v644 = vpop.f32.mrb[0].mxu0
  %645 = vmatprep.mubr.f32.mxu0 0.0
  %646 = vmatmul.mubr.f32.gmra.mrb[0].mxu0 %v460
  %v647 = vpop.f32.mrb[0].mxu0
  %v648 = vadd.f32 %v504, %v647
  %v649 = vpop.f32.mrb[0].mxu0
  %650 = vmatprep.mubr.f32.mxu0 0.0
  %651 = vmatmul.mubr.f32.gmra.mrb[0].mxu0 %v461
  %v652 = vpop.f32.mrb[0].mxu0
  %v653 = vadd.f32 %v504, %v652
  %v654 = vpop.f32.mrb[0].mxu0
  %655 = vmatprep.mubr.f32.mxu0 0.0
  %656 = vmatmul.mubr.f32.gmra.mrb[0].mxu0 %v462
  %v657 = vpop.f32.mrb[0].mxu0
  %v658 = vadd.f32 %v504, %v657
  %v659 = vpop.f32.mrb[0].mxu0
  %660 = vmatprep.mubr.f32.mxu0 0.0
  %661 = vmatmul.mubr.f32.gmra.mrb[0].mxu0 %v463
  %v662 = vpop.f32.mrb[0].mxu0
  %v663 = vadd.f32 %v504, %v662
  %v664 = vpop.f32.mrb[0].mxu0
  %665 = vmatprep.mubr.f32.mxu0 0.0
  %666 = vmatmul.mubr.f32.gmra.mrb[0].mxu0 %v464
  %v667 = vpop.f32.mrb[0].mxu0
  %v668 = vadd.f32 %v504, %v667
  %v669 = vpop.f32.mrb[0].mxu0
  %670 = vmatprep.mubr.f32.mxu0 0.0
  %671 = vmatmul.mubr.f32.gmra.mrb[0].mxu0 %v465
  %v672 = vpop.f32.mrb[0].mxu0
  %v673 = vadd.f32 %v504, %v672
  %v674 = vpop.f32.mrb[0].mxu0
  %675 = vmatprep.mubr.f32.mxu0 0.0
  %676 = vmatmul.mubr.f32.gmra.mrb[0].mxu0 %v466
  %v677 = vpop.f32.mrb[0].mxu0
  %v678 = vadd.f32 %v504, %v677
  %v679 = vpop.f32.mrb[0].mxu0
  %680 = vmatprep.mubr.f32.mxu0 0.0
  %681 = vmatmul.mubr.f32.gmra.mrb[0].mxu0 %v467
  %v682 = vpop.f32.mrb[0].mxu0
  %v683 = vadd.f32 %v504, %v682
  %v684 = vpop.f32.mrb[0].mxu0
  %685 = vmatprep.mubr.f32.mxu0 0.0
  %686 = vmatmul.mubr.f32.gmra.mrb[0].mxu0 %v468
  %v687 = vpop.f32.mrb[0].mxu0
  %v688 = vadd.f32 %v504, %v687
  %v689 = vpop.f32.mrb[0].mxu0
  %690 = vmatprep.mubr.f32.mxu0 0.0
  %691 = vmatmul.mubr.f32.gmra.mrb[0].mxu0 %v469
  %v692 = vpop.f32.mrb[0].mxu0
  %v693 = vadd.f32 %v504, %v692
  %v694 = vpop.f32.mrb[0].mxu0
  %695 = vmatprep.mubr.f32.mxu0 0.0
  %696 = vmatmul.mubr.f32.gmra.mrb[0].mxu0 %v470
  %v697 = vpop.f32.mrb[0].mxu0
  %v698 = vadd.f32 %v504, %v697
  %v699 = vpop.f32.mrb[0].mxu0
  %700 = vmatprep.mubr.f32.mxu0 0.0
  %701 = vmatmul.mubr.f32.gmra.mrb[0].mxu0 %v471
  %v702 = vpop.f32.mrb[0].mxu0
  %v703 = vadd.f32 %v504, %v702
  %v704 = vpop.f32.mrb[0].mxu0
  %705 = vmatprep.mubr.f32.mxu0 0.0
  %706 = vmatmul.mubr.f32.gmra.mrb[0].mxu0 %v472
  %v707 = vpop.f32.mrb[0].mxu0
  %v708 = vadd.f32 %v504, %v707
  %v709 = vpop.f32.mrb[0].mxu0
  %710 = vmatprep.mubr.f32.mxu0 0.0
  %711 = vmatmul.mubr.f32.gmra.mrb[0].mxu0 %v473
  %v712 = vpop.f32.mrb[0].mxu0
  %v713 = vadd.f32 %v504, %v712
  %v714 = vpop.f32.mrb[0].mxu0
  %715 = vmatprep.mubr.f32.mxu0 0.0
  %716 = vmatmul.mubr.f32.gmra.mrb[0].mxu0 %v474
  %v717 = vpop.f32.mrb[0].mxu0
  %v718 = vadd.f32 %v504, %v717
  %v719 = vpop.f32.mrb[0].mxu0
  %720 = vmatprep.mubr.f32.mxu0 0.0
  %721 = vmatmul.mubr.f32.gmra.mrb[0].mxu0 %v475
  %v722 = vpop.f32.mrb[0].mxu0
  %v723 = vadd.f32 %v504, %v722
  %v724 = vpop.f32.mrb[0].mxu0
  %725 = vmatprep.mubr.f32.mxu0 0.0
  %726 = vmatmul.mubr.f32.gmra.mrb[0].mxu0 %v476
  %v727 = vpop.f32.mrb[0].mxu0
  %v728 = vadd.f32 %v504, %v727
  %v729 = vpop.f32.mrb[0].mxu0
  %730 = vmatprep.mubr.f32.mxu0 0.0
  %731 = vmatmul.mubr.f32.gmra.mrb[0].mxu0 %v477
  %v732 = vpop.f32.mrb[0].mxu0
  %v733 = vadd.f32 %v504, %v732
  %v734 = vpop.f32.mrb[0].mxu0
  %735 = vmatprep.mubr.f32.mxu0 0.0
  %736 = vmatmul.mubr.f32.gmra.mrb[0].mxu0 %v478
  %v737 = vpop.f32.mrb[0].mxu0
  %v738 = vadd.f32 %v504, %v737
  %v739 = vpop.f32.mrb[0].mxu0
  %740 = vmatprep.mubr.f32.mxu0 0.0
  %741 = vmatmul.mubr.f32.gmra.mrb[0].mxu0 %v479
  %v742 = vpop.f32.mrb[0].mxu0
  %v743 = vadd.f32 %v504, %v742
  %v744 = vpop.f32.mrb[0].mxu0
  %745 = vmatprep.mubr.f32.mxu0 0.0
  %746 = vmatmul.mubr.f32.gmra.mrb[0].mxu0 %v480
  %v747 = vpop.f32.mrb[0].mxu0
  %v748 = vadd.f32 %v504, %v747
  %v749 = vpop.f32.mrb[0].mxu0
  %750 = vmatprep.mubr.f32.mxu0 0.0
  %751 = vmatmul.mubr.f32.gmra.mrb[0].mxu0 %v481
  %v752 = vpop.f32.mrb[0].mxu0
  %v753 = vadd.f32 %v504, %v752
  %v754 = vpop.f32.mrb[0].mxu0
  %755 = vmatprep.mubr.f32.mxu0 0.0
  %756 = vmatmul.mubr.f32.gmra.mrb[0].mxu0 %v482
  %v757 = vpop.f32.mrb[0].mxu0
  %v758 = vadd.f32 %v504, %v757
  %v759 = vpop.f32.mrb[0].mxu0
  %760 = vdwg.mxu0
  %v761 = vmax.f32 %v573, 0.0
  %v762 = vmax.f32 %v578, 0.0
  %v763 = vmax.f32 %v583, 0.0
  %v764 = vmax.f32 %v588, 0.0
  %v765 = vmax.f32 %v593, 0.0
  %v766 = vmax.f32 %v598, 0.0
  %v767 = vmax.f32 %v603, 0.0
  %v768 = vmax.f32 %v608, 0.0
  %v769 = vmax.f32 %v613, 0.0
  %v770 = vmax.f32 %v618, 0.0
  %v771 = vmax.f32 %v623, 0.0
  %v772 = vmax.f32 %v628, 0.0
  %v773 = vmax.f32 %v633, 0.0
  %v774 = vmax.f32 %v638, 0.0
  %v775 = vmax.f32 %v643, 0.0
  %v776 = vmax.f32 %v648, 0.0
  %v777 = vmax.f32 %v653, 0.0
  %v778 = vmax.f32 %v658, 0.0
  %v779 = vmax.f32 %v663, 0.0
  %v780 = vmax.f32 %v668, 0.0
  %v781 = vmax.f32 %v673, 0.0
  %v782 = vmax.f32 %v678, 0.0
  %v783 = vmax.f32 %v683, 0.0
  %v784 = vmax.f32 %v688, 0.0
  %v785 = vmax.f32 %v693, 0.0
  %v786 = vmax.f32 %v698, 0.0
  %v787 = vmax.f32 %v703, 0.0
  %v788 = vmax.f32 %v708, 0.0
  %v789 = vmax.f32 %v713, 0.0
  %v790 = vmax.f32 %v718, 0.0
  %v791 = vmax.f32 %v723, 0.0
  %v792 = vmax.f32 %v728, 0.0
  %v793 = vmax.f32 %v733, 0.0
  %v794 = vmax.f32 %v738, 0.0
  %v795 = vmax.f32 %v743, 0.0
  %v796 = vmax.f32 %v748, 0.0
  %v797 = vmax.f32 %v753, 0.0
  %v798 = vmax.f32 %v758, 0.0
  %v799 = vld [vmem:[%s5] sm:$0xff]
  %v800 = vld [vmem:[%s5 + $0x8] sm:$0xff]
  %v801 = vld [vmem:[%s5 + $0x10] sm:$0xff]
  %v802 = vld [vmem:[%s5 + $0x18] sm:$0xff]
  %v803 = vld [vmem:[%s5 + $0x20] sm:$0xff]
  %v804 = vld [vmem:[%s5 + $0x28] sm:$0xff]
  %v805 = vld [vmem:[%s5 + $0x30] sm:$0xff]
  %v806 = vld [vmem:[%s5 + $0x38] sm:$0xff]
  %v807 = vld [vmem:[%s5 + $0x40] sm:$0xff]
  %v808 = vld [vmem:[%s5 + $0x48] sm:$0xff]
  %v809 = vld [vmem:[%s5 + $0x50] sm:$0xff]
  %v810 = vld [vmem:[%s5 + $0x58] sm:$0xff]
  %v811 = vld [vmem:[%s5 + $0x60] sm:$0xff]
  %v812 = vld [vmem:[%s5 + $0x68] sm:$0xff]
  %v813 = vld [vmem:[%s5 + $0x70] sm:$0xff]
  %v814 = vld [vmem:[%s5 + $0x78] sm:$0xff]
  %v815 = vld [vmem:[%s6] sm:$0x1]
  %v817 = vlaneseq
  %v818 = vshrl.u32 %v817, 7
  %v819 = vsub.s32 0, %v818
  %v820 = vrot.slane %v815, %v819
  %822 = vmatprep.subr.mxu0 0.0
  %823 = vmatpush1.msra.mxu0 %v799
  %824 = vmatprep.subr.mxu0 0.0
  %825 = vmatpush1.msra.mxu0 %v800
  %826 = vmatprep.subr.mxu0 0.0
  %827 = vmatpush1.msra.mxu0 %v801
  %828 = vmatprep.subr.mxu0 0.0
  %829 = vmatpush1.msra.mxu0 %v802
  %830 = vmatprep.subr.mxu0 0.0
  %831 = vmatpush1.msra.mxu0 %v803
  %832 = vmatprep.subr.mxu0 0.0
  %833 = vmatpush1.msra.mxu0 %v804
  %834 = vmatprep.subr.mxu0 0.0
  %835 = vmatpush1.msra.mxu0 %v805
  %836 = vmatprep.subr.mxu0 0.0
  %837 = vmatpush1.msra.mxu0 %v806
  %838 = vmatprep.subr.mxu0 0.0
  %839 = vmatpush1.msra.mxu0 %v807
  %840 = vmatprep.subr.mxu0 0.0
  %841 = vmatpush1.msra.mxu0 %v808
  %842 = vmatprep.subr.mxu0 0.0
  %843 = vmatpush1.msra.mxu0 %v809
  %844 = vmatprep.subr.mxu0 0.0
  %845 = vmatpush1.msra.mxu0 %v810
  %846 = vmatprep.subr.mxu0 0.0
  %847 = vmatpush1.msra.mxu0 %v811
  %848 = vmatprep.subr.mxu0 0.0
  %849 = vmatpush1.msra.mxu0 %v812
  %850 = vmatprep.subr.mxu0 0.0
  %851 = vmatpush1.msra.mxu0 %v813
  %852 = vmatprep.subr.mxu0 0.0
  %853 = vmatpush1.msra.mxu0 %v814
  %854 = vmatprep.subr.mxu0 0.0
  %855 = vmatpush1.msra.mxu0 0.0
  %856 = vmatprep.subr.mxu0 0.0
  %857 = vmatpush1.msra.mxu0 0.0
  %858 = vmatprep.subr.mxu0 0.0
  %859 = vmatpush1.msra.mxu0 0.0
  %860 = vmatprep.subr.mxu0 0.0
  %861 = vmatpush1.msra.mxu0 0.0
  %862 = vmatprep.subr.mxu0 0.0
  %863 = vmatpush1.msra.mxu0 0.0
  %864 = vmatprep.subr.mxu0 0.0
  %865 = vmatpush1.msra.mxu0 0.0
  %866 = vmatprep.subr.mxu0 0.0
  %867 = vmatpush1.msra.mxu0 0.0
  %868 = vmatprep.subr.mxu0 0.0
  %869 = vmatpush1.msra.mxu0 0.0
  %870 = vmatprep.subr.mxu0 0.0
  %871 = vmatpush1.msra.mxu0 0.0
  %872 = vmatprep.subr.mxu0 0.0
  %873 = vmatpush1.msra.mxu0 0.0
  %874 = vmatprep.subr.mxu0 0.0
  %875 = vmatpush1.msra.mxu0 0.0
  %876 = vmatprep.subr.mxu0 0.0
  %877 = vmatpush1.msra.mxu0 0.0
  %878 = vmatprep.subr.mxu0 0.0
  %879 = vmatpush1.msra.mxu0 0.0
  %880 = vmatprep.subr.mxu0 0.0
  %881 = vmatpush1.msra.mxu0 0.0
  %882 = vmatprep.subr.mxu0 0.0
  %883 = vmatpush1.msra.mxu0 0.0
  %884 = vmatprep.subr.mxu0 0.0
  %885 = vmatpush1.msra.mxu0 0.0
  %886 = vmatprep.mubr.f32.mxu0 0.0
  %887 = vmatmul.mubr.f32.gmra.mrb[0].mxu0 %v761
  %v888 = vpop.f32.mrb[0].mxu0
  %v889 = vadd.f32 %v820, %v888
  %v890 = vpop.f32.mrb[0].mxu0
  %891 = vmatprep.mubr.f32.mxu0 0.0
  %892 = vmatmul.mubr.f32.gmra.mrb[0].mxu0 %v762
  %v893 = vpop.f32.mrb[0].mxu0
  %v894 = vadd.f32 %v820, %v893
  %v895 = vpop.f32.mrb[0].mxu0
  %896 = vmatprep.mubr.f32.mxu0 0.0
  %897 = vmatmul.mubr.f32.gmra.mrb[0].mxu0 %v763
  %v898 = vpop.f32.mrb[0].mxu0
  %v899 = vadd.f32 %v820, %v898
  %v900 = vpop.f32.mrb[0].mxu0
  %901 = vmatprep.mubr.f32.mxu0 0.0
  %902 = vmatmul.mubr.f32.gmra.mrb[0].mxu0 %v764
  %v903 = vpop.f32.mrb[0].mxu0
  %v904 = vadd.f32 %v820, %v903
  %v905 = vpop.f32.mrb[0].mxu0
  %906 = vmatprep.mubr.f32.mxu0 0.0
  %907 = vmatmul.mubr.f32.gmra.mrb[0].mxu0 %v765
  %v908 = vpop.f32.mrb[0].mxu0
  %v909 = vadd.f32 %v820, %v908
  %v910 = vpop.f32.mrb[0].mxu0
  %911 = vmatprep.mubr.f32.mxu0 0.0
  %912 = vmatmul.mubr.f32.gmra.mrb[0].mxu0 %v766
  %v913 = vpop.f32.mrb[0].mxu0
  %v914 = vadd.f32 %v820, %v913
  %v915 = vpop.f32.mrb[0].mxu0
  %916 = vmatprep.mubr.f32.mxu0 0.0
  %917 = vmatmul.mubr.f32.gmra.mrb[0].mxu0 %v767
  %v918 = vpop.f32.mrb[0].mxu0
  %v919 = vadd.f32 %v820, %v918
  %v920 = vpop.f32.mrb[0].mxu0
  %921 = vmatprep.mubr.f32.mxu0 0.0
  %922 = vmatmul.mubr.f32.gmra.mrb[0].mxu0 %v768
  %v923 = vpop.f32.mrb[0].mxu0
  %v924 = vadd.f32 %v820, %v923
  %v925 = vpop.f32.mrb[0].mxu0
  %926 = vmatprep.mubr.f32.mxu0 0.0
  %927 = vmatmul.mubr.f32.gmra.mrb[0].mxu0 %v769
  %v928 = vpop.f32.mrb[0].mxu0
  %v929 = vadd.f32 %v820, %v928
  %v930 = vpop.f32.mrb[0].mxu0
  %931 = vmatprep.mubr.f32.mxu0 0.0
  %932 = vmatmul.mubr.f32.gmra.mrb[0].mxu0 %v770
  %v933 = vpop.f32.mrb[0].mxu0
  %v934 = vadd.f32 %v820, %v933
  %v935 = vpop.f32.mrb[0].mxu0
  %936 = vmatprep.mubr.f32.mxu0 0.0
  %937 = vmatmul.mubr.f32.gmra.mrb[0].mxu0 %v771
  %v938 = vpop.f32.mrb[0].mxu0
  %v939 = vadd.f32 %v820, %v938
  %v940 = vpop.f32.mrb[0].mxu0
  %941 = vmatprep.mubr.f32.mxu0 0.0
  %942 = vmatmul.mubr.f32.gmra.mrb[0].mxu0 %v772
  %v943 = vpop.f32.mrb[0].mxu0
  %v944 = vadd.f32 %v820, %v943
  %v945 = vpop.f32.mrb[0].mxu0
  %946 = vmatprep.mubr.f32.mxu0 0.0
  %947 = vmatmul.mubr.f32.gmra.mrb[0].mxu0 %v773
  %v948 = vpop.f32.mrb[0].mxu0
  %v949 = vadd.f32 %v820, %v948
  %v950 = vpop.f32.mrb[0].mxu0
  %951 = vmatprep.mubr.f32.mxu0 0.0
  %952 = vmatmul.mubr.f32.gmra.mrb[0].mxu0 %v774
  %v953 = vpop.f32.mrb[0].mxu0
  %v954 = vadd.f32 %v820, %v953
  %v955 = vpop.f32.mrb[0].mxu0
  %956 = vmatprep.mubr.f32.mxu0 0.0
  %957 = vmatmul.mubr.f32.gmra.mrb[0].mxu0 %v775
  %v958 = vpop.f32.mrb[0].mxu0
  %v959 = vadd.f32 %v820, %v958
  %v960 = vpop.f32.mrb[0].mxu0
  %961 = vmatprep.mubr.f32.mxu0 0.0
  %962 = vmatmul.mubr.f32.gmra.mrb[0].mxu0 %v776
  %v963 = vpop.f32.mrb[0].mxu0
  %v964 = vadd.f32 %v820, %v963
  %v965 = vpop.f32.mrb[0].mxu0
  %966 = vmatprep.mubr.f32.mxu0 0.0
  %967 = vmatmul.mubr.f32.gmra.mrb[0].mxu0 %v777
  %v968 = vpop.f32.mrb[0].mxu0
  %v969 = vadd.f32 %v820, %v968
  %v970 = vpop.f32.mrb[0].mxu0
  %971 = vmatprep.mubr.f32.mxu0 0.0
  %972 = vmatmul.mubr.f32.gmra.mrb[0].mxu0 %v778
  %v973 = vpop.f32.mrb[0].mxu0
  %v974 = vadd.f32 %v820, %v973
  %v975 = vpop.f32.mrb[0].mxu0
  %976 = vmatprep.mubr.f32.mxu0 0.0
  %977 = vmatmul.mubr.f32.gmra.mrb[0].mxu0 %v779
  %v978 = vpop.f32.mrb[0].mxu0
  %v979 = vadd.f32 %v820, %v978
  %v980 = vpop.f32.mrb[0].mxu0
  %981 = vmatprep.mubr.f32.mxu0 0.0
  %982 = vmatmul.mubr.f32.gmra.mrb[0].mxu0 %v780
  %v983 = vpop.f32.mrb[0].mxu0
  %v984 = vadd.f32 %v820, %v983
  %v985 = vpop.f32.mrb[0].mxu0
  %986 = vmatprep.mubr.f32.mxu0 0.0
  %987 = vmatmul.mubr.f32.gmra.mrb[0].mxu0 %v781
  %v988 = vpop.f32.mrb[0].mxu0
  %v989 = vadd.f32 %v820, %v988
  %v990 = vpop.f32.mrb[0].mxu0
  %991 = vmatprep.mubr.f32.mxu0 0.0
  %992 = vmatmul.mubr.f32.gmra.mrb[0].mxu0 %v782
  %v993 = vpop.f32.mrb[0].mxu0
  %v994 = vadd.f32 %v820, %v993
  %v995 = vpop.f32.mrb[0].mxu0
  %996 = vmatprep.mubr.f32.mxu0 0.0
  %997 = vmatmul.mubr.f32.gmra.mrb[0].mxu0 %v783
  %v998 = vpop.f32.mrb[0].mxu0
  %v999 = vadd.f32 %v820, %v998
  %v1000 = vpop.f32.mrb[0].mxu0
  %1001 = vmatprep.mubr.f32.mxu0 0.0
  %1002 = vmatmul.mubr.f32.gmra.mrb[0].mxu0 %v784
  %v1003 = vpop.f32.mrb[0].mxu0
  %v1004 = vadd.f32 %v820, %v1003
  %v1005 = vpop.f32.mrb[0].mxu0
  %1006 = vmatprep.mubr.f32.mxu0 0.0
  %1007 = vmatmul.mubr.f32.gmra.mrb[0].mxu0 %v785
  %v1008 = vpop.f32.mrb[0].mxu0
  %v1009 = vadd.f32 %v820, %v1008
  %v1010 = vpop.f32.mrb[0].mxu0
  %1011 = vmatprep.mubr.f32.mxu0 0.0
  %1012 = vmatmul.mubr.f32.gmra.mrb[0].mxu0 %v786
  %v1013 = vpop.f32.mrb[0].mxu0
  %v1014 = vadd.f32 %v820, %v1013
  %v1015 = vpop.f32.mrb[0].mxu0
  %1016 = vmatprep.mubr.f32.mxu0 0.0
  %1017 = vmatmul.mubr.f32.gmra.mrb[0].mxu0 %v787
  %v1018 = vpop.f32.mrb[0].mxu0
  %v1019 = vadd.f32 %v820, %v1018
  %v1020 = vpop.f32.mrb[0].mxu0
  %1021 = vmatprep.mubr.f32.mxu0 0.0
  %1022 = vmatmul.mubr.f32.gmra.mrb[0].mxu0 %v788
  %v1023 = vpop.f32.mrb[0].mxu0
  %v1024 = vadd.f32 %v820, %v1023
  %v1025 = vpop.f32.mrb[0].mxu0
  %1026 = vmatprep.mubr.f32.mxu0 0.0
  %1027 = vmatmul.mubr.f32.gmra.mrb[0].mxu0 %v789
  %v1028 = vpop.f32.mrb[0].mxu0
  %v1029 = vadd.f32 %v820, %v1028
  %v1030 = vpop.f32.mrb[0].mxu0
  %1031 = vmatprep.mubr.f32.mxu0 0.0
  %1032 = vmatmul.mubr.f32.gmra.mrb[0].mxu0 %v790
  %v1033 = vpop.f32.mrb[0].mxu0
  %v1034 = vadd.f32 %v820, %v1033
  %v1035 = vpop.f32.mrb[0].mxu0
  %1036 = vmatprep.mubr.f32.mxu0 0.0
  %1037 = vmatmul.mubr.f32.gmra.mrb[0].mxu0 %v791
  %v1038 = vpop.f32.mrb[0].mxu0
  %v1039 = vadd.f32 %v820, %v1038
  %v1040 = vpop.f32.mrb[0].mxu0
  %1041 = vmatprep.mubr.f32.mxu0 0.0
  %1042 = vmatmul.mubr.f32.gmra.mrb[0].mxu0 %v792
  %v1043 = vpop.f32.mrb[0].mxu0
  %v1044 = vadd.f32 %v820, %v1043
  %v1045 = vpop.f32.mrb[0].mxu0
  %1046 = vmatprep.mubr.f32.mxu0 0.0
  %1047 = vmatmul.mubr.f32.gmra.mrb[0].mxu0 %v793
  %v1048 = vpop.f32.mrb[0].mxu0
  %v1049 = vadd.f32 %v820, %v1048
  %v1050 = vpop.f32.mrb[0].mxu0
  %1051 = vmatprep.mubr.f32.mxu0 0.0
  %1052 = vmatmul.mubr.f32.gmra.mrb[0].mxu0 %v794
  %v1053 = vpop.f32.mrb[0].mxu0
  %v1054 = vadd.f32 %v820, %v1053
  %v1055 = vpop.f32.mrb[0].mxu0
  %1056 = vmatprep.mubr.f32.mxu0 0.0
  %1057 = vmatmul.mubr.f32.gmra.mrb[0].mxu0 %v795
  %v1058 = vpop.f32.mrb[0].mxu0
  %v1059 = vadd.f32 %v820, %v1058
  %v1060 = vpop.f32.mrb[0].mxu0
  %1061 = vmatprep.mubr.f32.mxu0 0.0
  %1062 = vmatmul.mubr.f32.gmra.mrb[0].mxu0 %v796
  %v1063 = vpop.f32.mrb[0].mxu0
  %v1064 = vadd.f32 %v820, %v1063
  %v1065 = vpop.f32.mrb[0].mxu0
  %1066 = vmatprep.mubr.f32.mxu0 0.0
  %1067 = vmatmul.mubr.f32.gmra.mrb[0].mxu0 %v797
  %v1068 = vpop.f32.mrb[0].mxu0
  %v1069 = vadd.f32 %v820, %v1068
  %v1070 = vpop.f32.mrb[0].mxu0
  %1071 = vmatprep.mubr.f32.mxu0 0.0
  %1072 = vmatmul.mubr.f32.gmra.mrb[0].mxu0 %v798
  %v1073 = vpop.f32.mrb[0].mxu0
  %v1074 = vadd.f32 %v820, %v1073
  %v1075 = vpop.f32.mrb[0].mxu0
  %1076 = vdwg.mxu0
  %1077 = vst [vmem:[%s7] sm:$0xff] %v889
  %1078 = vst [vmem:[%s7 + $0x8] sm:$0xff] %v894
  %1079 = vst [vmem:[%s7 + $0x10] sm:$0xff] %v899
  %1080 = vst [vmem:[%s7 + $0x18] sm:$0xff] %v904
  %1081 = vst [vmem:[%s7 + $0x20] sm:$0xff] %v909
  %1082 = vst [vmem:[%s7 + $0x28] sm:$0xff] %v914
  %1083 = vst [vmem:[%s7 + $0x30] sm:$0xff] %v919
  %1084 = vst [vmem:[%s7 + $0x38] sm:$0xff] %v924
  %1085 = vst [vmem:[%s7 + $0x40] sm:$0xff] %v929
  %1086 = vst [vmem:[%s7 + $0x48] sm:$0xff] %v934
  %1087 = vst [vmem:[%s7 + $0x50] sm:$0xff] %v939
  %1088 = vst [vmem:[%s7 + $0x58] sm:$0xff] %v944
  %1089 = vst [vmem:[%s7 + $0x60] sm:$0xff] %v949
  %1090 = vst [vmem:[%s7 + $0x68] sm:$0xff] %v954
  %1091 = vst [vmem:[%s7 + $0x70] sm:$0xff] %v959
  %1092 = vst [vmem:[%s7 + $0x78] sm:$0xff] %v964
  %1093 = vst [vmem:[%s7 + $0x80] sm:$0xff] %v969
  %1094 = vst [vmem:[%s7 + $0x88] sm:$0xff] %v974
  %1095 = vst [vmem:[%s7 + $0x90] sm:$0xff] %v979
  %1096 = vst [vmem:[%s7 + $0x98] sm:$0xff] %v984
  %1097 = vst [vmem:[%s7 + $0xa0] sm:$0xff] %v989
  %1098 = vst [vmem:[%s7 + $0xa8] sm:$0xff] %v994
  %1099 = vst [vmem:[%s7 + $0xb0] sm:$0xff] %v999
  %1100 = vst [vmem:[%s7 + $0xb8] sm:$0xff] %v1004
  %1101 = vst [vmem:[%s7 + $0xc0] sm:$0xff] %v1009
  %1102 = vst [vmem:[%s7 + $0xc8] sm:$0xff] %v1014
  %1103 = vst [vmem:[%s7 + $0xd0] sm:$0xff] %v1019
  %1104 = vst [vmem:[%s7 + $0xd8] sm:$0xff] %v1024
  %1105 = vst [vmem:[%s7 + $0xe0] sm:$0xff] %v1029
  %1106 = vst [vmem:[%s7 + $0xe8] sm:$0xff] %v1034
  %1107 = vst [vmem:[%s7 + $0xf0] sm:$0xff] %v1039
  %1108 = vst [vmem:[%s7 + $0xf8] sm:$0xff] %v1044
  %1109 = vst [vmem:[%s7 + $0x100] sm:$0xff] %v1049
  %1110 = vst [vmem:[%s7 + $0x108] sm:$0xff] %v1054
  %1111 = vst [vmem:[%s7 + $0x110] sm:$0xff] %v1059
  %1112 = vst [vmem:[%s7 + $0x118] sm:$0xff] %v1064
  %1113 = vst [vmem:[%s7 + $0x120] sm:$0xff] %v1069
  %1114 = vst [vmem:[%s7 + $0x128] sm:$0xff] %v1074
  // Predicated region
  $region30: #{_decoder_forward_impl.1} parent=0 // pred_check
    _
  $region31: #{_decoder_forward_impl.1} parent=0 // pred_check_branch
    %1116 = sbr.rel (0) target = $region33
  $region32: #{_decoder_forward_impl.1} parent=0 // pred_region
    _
  $region33: #{_decoder_forward_impl.1} parent=0 // pred_fallthru
    _
  // Predicated region
  $region34: #{_decoder_forward_impl.1} parent=0 // pred_check
    _
  $region35: #{_decoder_forward_impl.1} parent=0 // pred_check_branch
    %1118 = sbr.rel (0) target = $region37
  $region36: #{_decoder_forward_impl.1} parent=0 // pred_region
    _
  $region37: #{_decoder_forward_impl.1} parent=0 // pred_fallthru
    _

</llo_original>
